<compile_context>
chip_gen: v6e
topology: v6e:2x2x1
jax: 0.10.0
libtpu: 0.0.40
codegen_flags: <defaults>
</compile_context>

<pallas_src>
import functools

import jax
import jax.numpy as jnp
from jax.experimental import pallas as pl
from jax.experimental.pallas import tpu as pltpu

EPS = 1e-5


# --------------------------- fused kernel ---------------------------
def _make_resnet_block_kernel(H, has_proj):
    def kernel(x_ref, bw1_ref, bw2_ref, pm_ref, bnp_ref, *rest):
        if has_proj:
            pr_ref, out_ref = rest
        else:
            (out_ref,) = rest

        f32, bf16 = jnp.float32, jnp.bfloat16
        x = x_ref[...]                                   # (N*H, W*Cin) f32
        nh = x.shape[0]

        # Image-row index of every (n,h) sublane row -> height-halo masks that
        # realize the conv zero padding AND the batch boundaries.
        h_idx = jax.lax.broadcasted_iota(jnp.int32, (nh, 1), 0) % H
        top = h_idx == 0
        bot = h_idx == H - 1

        def conv3x3(z, bw_ref, b_row):
            # Height halo via XLU roll + VPU mask (no MXU shift matmuls), then
            # ONE fused bf16 matmul over all three ky taps (K = 3 * lanes).
            zu = jnp.where(top, 0.0, pltpu.roll(z, 1, axis=0))
            zd = jnp.where(bot, 0.0, pltpu.roll(z, nh - 1, axis=0))
            lhs = jnp.concatenate([zu, z, zd], axis=1).astype(bf16)
            return jnp.dot(lhs, bw_ref[...], preferred_element_type=f32) + b_row

        def batchnorm(y, g_row, be_row):
            # Single-pass training-mode batch stats: one Pm matmul maps the
            # lane-sums of [y; y*y] to per-channel mean and E[y^2], broadcast
            # back onto the lanes.  var = E[y^2] - mean^2 (biased).
            s = jnp.concatenate([jnp.sum(y, axis=0, keepdims=True),
                                 jnp.sum(y * y, axis=0, keepdims=True)], axis=0)
            ms = jnp.dot(s, pm_ref[...], preferred_element_type=f32)  # (2, W*C)
            mean = ms[0:1, :]
            var = ms[1:2, :] - mean * mean
            return (y - mean) * jax.lax.rsqrt(var + EPS) * g_row + be_row

        bnp = bnp_ref[...]                               # (8, W*Cout) f32
        b1, g1, be1 = bnp[0:1, :], bnp[1:2, :], bnp[2:3, :]
        b2, g2, be2 = bnp[3:4, :], bnp[4:5, :], bnp[5:6, :]

        # conv1 -> BN -> ReLU
        y1 = jnp.maximum(batchnorm(conv3x3(x, bw1_ref, b1), g1, be1), 0.0)
        # conv2 -> BN
        y2 = batchnorm(conv3x3(y1, bw2_ref, b2), g2, be2)

        # residual (1x1 projection or identity) + ReLU, lane-dense store
        if has_proj:
            res = jnp.dot(x.astype(bf16), pr_ref[...],
                          preferred_element_type=f32) + bnp[6:7, :]
        else:
            res = x
        out_ref[...] = jnp.maximum(y2 + res, 0.0).astype(out_ref.dtype)

    return kernel


# --------------------------- parameter prep ---------------------------
def _band_weights(w_hwio, width):
    """(3,3,Ci,Co) HWIO weights -> (3*width*Ci, width*Co) stacked banded bf16.

    The band realizes the kx taps and the width-direction zero padding; the
    three ky bands are stacked row-wise so the kernel contracts them in a
    single matmul against [roll(+1) | x | roll(-1)]."""
    ci, co = w_hwio.shape[2], w_hwio.shape[3]
    bands = []
    for ky in range(3):
        bw = jnp.zeros((width * ci, width * co), jnp.float32)
        for kx in range(3):
            shift = jnp.eye(width, k=1 - kx, dtype=jnp.float32)
            bw = bw + jnp.kron(shift, w_hwio[ky, kx].astype(jnp.float32))
        bands.append(bw)
    return jnp.concatenate(bands, axis=0).astype(jnp.bfloat16)


def _row(v, width):
    """(C,) per-channel vector -> (1, width*C) lane row (lane = w*C + c)."""
    return jnp.tile(v.astype(jnp.float32), width).reshape(1, -1)


def prepare_block_params(params, N, H, W):
    """One-time conversion of module parameters into kernel-ready arrays."""
    cin = params["w1"].shape[2]
    cout = params["w1"].shape[3]

    # per-channel averaging projection on the lane axis (includes 1/(N*H*W)).
    lane = jnp.arange(W * cout)
    pm = (lane[:, None] % cout == lane[None, :] % cout).astype(jnp.float32)
    pm = pm / float(N * H * W)

    # conv biases, BN gamma/beta and residual bias packed into one (8, W*Cout)
    # slab (one DMA instead of seven).
    rows = [_row(params["b1"], W), _row(params["g1"], W), _row(params["be1"], W),
            _row(params["b2"], W), _row(params["g2"], W), _row(params["be2"], W),
            (_row(params["br"], W) if "wr" in params
             else jnp.zeros((1, W * cout), jnp.float32)),
            jnp.zeros((1, W * cout), jnp.float32)]
    bnp = jnp.concatenate(rows, axis=0)

    prep = {
        "pm": pm, "bnp": bnp,
        "bw1": _band_weights(params["w1"], W),
        "bw2": _band_weights(params["w2"], W),
    }
    if "wr" in params:
        prep["pr"] = jnp.kron(jnp.eye(W, dtype=jnp.float32),
                              params["wr"].astype(jnp.float32)).astype(jnp.bfloat16)
    else:
        assert cin == cout, "identity residual requires in_channels == out_channels"
    return prep


# --------------------------- forward wrapper ---------------------------
@functools.partial(jax.jit, static_argnames=("stride",))
def resnet_block_forward(x_nchw, prep, stride=1):
    """Pallas ResNetBlock forward. Input/output are NCHW (PyTorch convention)."""
    assert stride == 1  # TODO(synk): stride > 1 path not implemented in-kernel.
    N, Cin, H, W = x_nchw.shape
    Cout = prep["bw1"].shape[-1] // W
    has_proj = "pr" in prep

    # NCHW -> (N*H, W*Cin) slab: rows = (n, h), lanes = (w, c).
    x2d = jnp.transpose(x_nchw, (0, 2, 3, 1)).astype(jnp.float32)
    x2d = x2d.reshape(N * H, W * Cin)

    args = [x2d, prep["bw1"], prep["bw2"], prep["pm"], prep["bnp"]]
    if has_proj:
        args.append(prep["pr"])

    def full_spec(shape):
        nd = len(shape)
        return pl.BlockSpec(shape, lambda i, _nd=nd: (0,) * _nd)

    out2d = pl.pallas_call(
        _make_resnet_block_kernel(H, has_proj),
        out_shape=jax.ShapeDtypeStruct((N * H, W * Cout), jnp.float32),
        grid=(1,),
        in_specs=[full_spec(a.shape) for a in args],
        out_specs=full_spec((N * H, W * Cout)),
        compiler_params=pltpu.CompilerParams(
            dimension_semantics=("arbitrary",)),
    )(*args)

    out = out2d.reshape(N, H, W, Cout)
    return jnp.transpose(out, (0, 3, 1, 2))              # back to NCHW


# ---------------- plain-JAX reference (for correctness check) ----------------
def reference_forward(x_nchw, params):
    x = jnp.transpose(x_nchw, (0, 2, 3, 1)).astype(jnp.float32)

    def conv(inp, w, b, pad):
        y = jax.lax.conv_general_dilated(
            inp, w, window_strides=(1, 1), padding=((pad, pad), (pad, pad)),
            dimension_numbers=("NHWC", "HWIO", "NHWC"),
            precision=jax.lax.Precision.HIGHEST)
        return y + b.reshape(1, 1, 1, -1)

    def bn(y, g, be):
        mu = y.mean(axis=(0, 1, 2))
        var = ((y - mu) ** 2).mean(axis=(0, 1, 2))
        return (y - mu) * jax.lax.rsqrt(var + EPS) * g + be

    y = conv(x, params["w1"], params["b1"], 1)
    y = jax.nn.relu(bn(y, params["g1"], params["be1"]))
    y = conv(y, params["w2"], params["b2"], 1)
    y = bn(y, params["g2"], params["be2"])
    if "wr" in params:
        r = conv(x, params["wr"][None, None], params["br"], 0)
    else:
        r = x
    return jnp.transpose(jax.nn.relu(y + r), (0, 3, 1, 2))


def init_params(key, in_channels, out_channels):
    ks = jax.random.split(key, 10)
    f32 = jnp.float32
    return {
        "w1": 0.2 * jax.random.normal(ks[0], (3, 3, in_channels, out_channels), f32),
        "b1": 0.1 * jax.random.normal(ks[1], (out_channels,), f32),
        "g1": 1.0 + 0.1 * jax.random.normal(ks[2], (out_channels,), f32),
        "be1": 0.1 * jax.random.normal(ks[3], (out_channels,), f32),
        "w2": 0.2 * jax.random.normal(ks[4], (3, 3, out_channels, out_channels), f32),
        "b2": 0.1 * jax.random.normal(ks[5], (out_channels,), f32),
        "g2": 1.0 + 0.1 * jax.random.normal(ks[6], (out_channels,), f32),
        "be2": 0.1 * jax.random.normal(ks[7], (out_channels,), f32),
        # in_channels != out_channels -> projection residual (1x1 conv with bias)
        "wr": 0.2 * jax.random.normal(ks[8], (in_channels, out_channels), f32),
        "br": 0.1 * jax.random.normal(ks[9], (out_channels,), f32),
    }


if __name__ == "__main__":
    key = jax.random.PRNGKey(0)
    kx, kp = jax.random.split(key)

    N, Cin, Cout, H, W = 2, 4, 8, 16, 16          # small ResNet8-style block
    x = jax.random.normal(kx, (N, Cin, H, W), jnp.float32)   # NCHW like PyTorch
    params = init_params(kp, Cin, Cout)
    prep = prepare_block_params(params, N, H, W)

    out = resnet_block_forward(x, prep)
    out = jax.block_until_ready(out)

    ref = reference_forward(x, params)
    # bf16 MXU operands (f32 accumulation) -> tolerance loosened vs the pure-f32
    # version, per the review's correctness note.
    err = float(jnp.max(jnp.abs(out - ref)))
    rel = float(jnp.linalg.norm(out - ref) / (jnp.linalg.norm(ref) + 1e-9))
    if err > 0.1 or rel > 0.03:
        raise AssertionError(
            f"mismatch vs reference: max abs err = {err}, rel L2 err = {rel}")

    print("KERNEL_OK")
</pallas_src>

<mosaic_0001>
module attributes {stable_mosaic.version = 11 : i64} {
  func.func @kernel(%arg0: i32, %arg1: memref<32x64xf32, #tpu.memory_space<vmem>>, %arg2: memref<192x128xbf16, #tpu.memory_space<vmem>>, %arg3: memref<384x128xbf16, #tpu.memory_space<vmem>>, %arg4: memref<128x128xf32, #tpu.memory_space<vmem>>, %arg5: memref<8x128xf32, #tpu.memory_space<vmem>>, %arg6: memref<64x128xbf16, #tpu.memory_space<vmem>>, %arg7: memref<32x128xf32, #tpu.memory_space<vmem>>) attributes {dimension_semantics = [#tpu.dimension_semantics<arbitrary>], iteration_bounds = array<i64: 1>, scalar_prefetch = 0 : i64, scratch_operands = 0 : i64, tpu.core_type = #tpu.core_type<tc>, window_params = [{pipeline_mode = #tpu.pipeline_mode<synchronous>, transform_indices = @transform_0, window_bounds = array<i64: 32, 64>}, {pipeline_mode = #tpu.pipeline_mode<synchronous>, transform_indices = @transform_1, window_bounds = array<i64: 192, 128>}, {pipeline_mode = #tpu.pipeline_mode<synchronous>, transform_indices = @transform_2, window_bounds = array<i64: 384, 128>}, {pipeline_mode = #tpu.pipeline_mode<synchronous>, transform_indices = @transform_3, window_bounds = array<i64: 128, 128>}, {pipeline_mode = #tpu.pipeline_mode<synchronous>, transform_indices = @transform_4, window_bounds = array<i64: 8, 128>}, {pipeline_mode = #tpu.pipeline_mode<synchronous>, transform_indices = @transform_5, window_bounds = array<i64: 64, 128>}, {pipeline_mode = #tpu.pipeline_mode<synchronous>, transform_indices = @transform_6, window_bounds = array<i64: 32, 128>}]} {
    %c0 = arith.constant 0 : index
    %c0_0 = arith.constant 0 : index
    %0 = vector.load %arg1[%c0, %c0_0] : memref<32x64xf32, #tpu.memory_space<vmem>>, vector<32x64xf32>
    %1 = tpu.iota {dimensions = array<i32: 0>} : vector<32x1xi32>
    %c16_i32 = arith.constant 16 : i32
    %c0_i32 = arith.constant 0 : i32
    %2 = arith.cmpi eq, %c16_i32, %c0_i32 : i32
    %c1_i32 = arith.constant 1 : i32
    %3 = arith.select %2, %c1_i32, %c16_i32 : i32
    %4 = vector.broadcast %3 : i32 to vector<32x1xi32>
    %5 = arith.remsi %1, %4 : vector<32x1xi32>
    %c0_i32_1 = arith.constant 0 : i32
    %6 = vector.broadcast %c0_i32_1 : i32 to vector<32x1xi32>
    %7 = arith.cmpi ne, %5, %6 : vector<32x1xi32>
    %c0_i32_2 = arith.constant 0 : i32
    %8 = vector.broadcast %c0_i32_2 : i32 to vector<32x1xi32>
    %9 = arith.cmpi slt, %5, %8 : vector<32x1xi32>
    %c0_i32_3 = arith.constant 0 : i32
    %10 = arith.cmpi slt, %3, %c0_i32_3 : i32
    %11 = vector.broadcast %10 : i1 to vector<32x1xi1>
    %12 = vector.broadcast %11 : vector<32x1xi1> to vector<32x1xi1>
    %13 = arith.xori %9, %12 : vector<32x1xi1>
    %14 = arith.andi %13, %7 : vector<32x1xi1>
    %15 = vector.broadcast %3 : i32 to vector<32x1xi32>
    %16 = arith.addi %5, %15 : vector<32x1xi32>
    %17 = arith.select %14, %16, %5 : vector<32x1xi1>, vector<32x1xi32>
    %c0_i32_4 = arith.constant 0 : i32
    %18 = vector.broadcast %c0_i32_4 : i32 to vector<32x1xi32>
    %19 = arith.cmpi eq, %17, %18 : vector<32x1xi32>
    %c15_i32 = arith.constant 15 : i32
    %20 = vector.broadcast %c15_i32 : i32 to vector<32x1xi32>
    %21 = arith.cmpi eq, %17, %20 : vector<32x1xi32>
    %c0_5 = arith.constant 0 : index
    %c0_6 = arith.constant 0 : index
    %22 = vector.load %arg5[%c0_5, %c0_6] : memref<8x128xf32, #tpu.memory_space<vmem>>, vector<8x128xf32>
    %23 = vector.extract_strided_slice %22 {offsets = [0, 0], sizes = [1, 128], strides = [1, 1]} : vector<8x128xf32> to vector<1x128xf32>
    %24 = vector.extract_strided_slice %22 {offsets = [1, 0], sizes = [1, 128], strides = [1, 1]} : vector<8x128xf32> to vector<1x128xf32>
    %25 = vector.extract_strided_slice %22 {offsets = [2, 0], sizes = [1, 128], strides = [1, 1]} : vector<8x128xf32> to vector<1x128xf32>
    %26 = vector.extract_strided_slice %22 {offsets = [3, 0], sizes = [1, 128], strides = [1, 1]} : vector<8x128xf32> to vector<1x128xf32>
    %27 = vector.extract_strided_slice %22 {offsets = [4, 0], sizes = [1, 128], strides = [1, 1]} : vector<8x128xf32> to vector<1x128xf32>
    %28 = vector.extract_strided_slice %22 {offsets = [5, 0], sizes = [1, 128], strides = [1, 1]} : vector<8x128xf32> to vector<1x128xf32>
    %c1_i32_7 = arith.constant 1 : i32
    %29 = tpu.dynamic_rotate %0 by %c1_i32_7 dim 0 : vector<32x64xf32>, i32 -> vector<32x64xf32>
    %cst = arith.constant 0.000000e+00 : f32
    %30 = vector.shape_cast %19 : vector<32x1xi1> to vector<32x1xi1>
    %31 = vector.broadcast %30 : vector<32x1xi1> to vector<32x64xi1>
    %32 = vector.broadcast %cst : f32 to vector<32x64xf32>
    %33 = arith.select %31, %32, %29 : vector<32x64xi1>, vector<32x64xf32>
    %c31_i32 = arith.constant 31 : i32
    %34 = tpu.dynamic_rotate %0 by %c31_i32 dim 0 : vector<32x64xf32>, i32 -> vector<32x64xf32>
    %cst_8 = arith.constant 0.000000e+00 : f32
    %35 = vector.shape_cast %21 : vector<32x1xi1> to vector<32x1xi1>
    %36 = vector.broadcast %35 : vector<32x1xi1> to vector<32x64xi1>
    %37 = vector.broadcast %cst_8 : f32 to vector<32x64xf32>
    %38 = arith.select %36, %37, %34 : vector<32x64xi1>, vector<32x64xf32>
    %39 = tpu.concatenate %33, %0, %38 in 1 : vector<32x64xf32>, vector<32x64xf32>, vector<32x64xf32> -> vector<32x192xf32>
    %40 = arith.truncf %39 : vector<32x192xf32> to vector<32x192xbf16>
    %c0_9 = arith.constant 0 : index
    %c0_10 = arith.constant 0 : index
    %41 = vector.load %arg2[%c0_9, %c0_10] : memref<192x128xbf16, #tpu.memory_space<vmem>>, vector<192x128xbf16>
    %cst_11 = arith.constant dense<0.000000e+00> : vector<32x128xf32>
    %42 = tpu.matmul %40, %41, %cst_11 {dimension_numbers = #tpu.dot_dimension_numbers<[1], [0], [0], [1], [0, 0, 1, 1], [], []>} : vector<32x192xbf16>, vector<192x128xbf16>, vector<32x128xf32> -> vector<32x128xf32>
    %43 = vector.broadcast %23 : vector<1x128xf32> to vector<32x128xf32>
    %44 = arith.addf %42, %43 : vector<32x128xf32>
    %cst_12 = arith.constant dense<0.000000e+00> : vector<128xf32>
    %45 = vector.multi_reduction <add>, %44, %cst_12 [0] : vector<32x128xf32> to vector<128xf32>
    %46 = vector.shape_cast %45 : vector<128xf32> to vector<1x128xf32>
    %47 = arith.mulf %44, %44 : vector<32x128xf32>
    %cst_13 = arith.constant dense<0.000000e+00> : vector<128xf32>
    %48 = vector.multi_reduction <add>, %47, %cst_13 [0] : vector<32x128xf32> to vector<128xf32>
    %49 = vector.shape_cast %48 : vector<128xf32> to vector<1x128xf32>
    %50 = tpu.concatenate %46, %49 in 0 : vector<1x128xf32>, vector<1x128xf32> -> vector<2x128xf32>
    %c0_14 = arith.constant 0 : index
    %c0_15 = arith.constant 0 : index
    %51 = vector.load %arg4[%c0_14, %c0_15] : memref<128x128xf32, #tpu.memory_space<vmem>>, vector<128x128xf32>
    %cst_16 = arith.constant dense<0.000000e+00> : vector<2x128xf32>
    %52 = tpu.matmul %50, %51, %cst_16 {dimension_numbers = #tpu.dot_dimension_numbers<[1], [0], [0], [1], [0, 0, 1, 1], [], []>} : vector<2x128xf32>, vector<128x128xf32>, vector<2x128xf32> -> vector<2x128xf32>
    %53 = vector.extract_strided_slice %52 {offsets = [0, 0], sizes = [1, 128], strides = [1, 1]} : vector<2x128xf32> to vector<1x128xf32>
    %54 = vector.extract_strided_slice %52 {offsets = [1, 0], sizes = [1, 128], strides = [1, 1]} : vector<2x128xf32> to vector<1x128xf32>
    %55 = arith.mulf %53, %53 : vector<1x128xf32>
    %56 = arith.subf %54, %55 : vector<1x128xf32>
    %57 = vector.broadcast %53 : vector<1x128xf32> to vector<32x128xf32>
    %58 = arith.subf %44, %57 : vector<32x128xf32>
    %cst_17 = arith.constant 9.99999974E-6 : f32
    %59 = vector.broadcast %cst_17 : f32 to vector<1x128xf32>
    %60 = arith.addf %56, %59 : vector<1x128xf32>
    %61 = math.rsqrt %60 : vector<1x128xf32>
    %62 = vector.broadcast %61 : vector<1x128xf32> to vector<32x128xf32>
    %63 = arith.mulf %58, %62 : vector<32x128xf32>
    %64 = vector.broadcast %24 : vector<1x128xf32> to vector<32x128xf32>
    %65 = arith.mulf %63, %64 : vector<32x128xf32>
    %66 = vector.broadcast %25 : vector<1x128xf32> to vector<32x128xf32>
    %67 = arith.addf %65, %66 : vector<32x128xf32>
    %cst_18 = arith.constant 0.000000e+00 : f32
    %68 = vector.broadcast %cst_18 : f32 to vector<32x128xf32>
    %69 = arith.maximumf %67, %68 : vector<32x128xf32>
    %c1_i32_19 = arith.constant 1 : i32
    %70 = tpu.dynamic_rotate %69 by %c1_i32_19 dim 0 : vector<32x128xf32>, i32 -> vector<32x128xf32>
    %cst_20 = arith.constant 0.000000e+00 : f32
    %71 = vector.shape_cast %19 : vector<32x1xi1> to vector<32x1xi1>
    %72 = vector.broadcast %71 : vector<32x1xi1> to vector<32x128xi1>
    %73 = vector.broadcast %cst_20 : f32 to vector<32x128xf32>
    %74 = arith.select %72, %73, %70 : vector<32x128xi1>, vector<32x128xf32>
    %c31_i32_21 = arith.constant 31 : i32
    %75 = tpu.dynamic_rotate %69 by %c31_i32_21 dim 0 : vector<32x128xf32>, i32 -> vector<32x128xf32>
    %cst_22 = arith.constant 0.000000e+00 : f32
    %76 = vector.shape_cast %21 : vector<32x1xi1> to vector<32x1xi1>
    %77 = vector.broadcast %76 : vector<32x1xi1> to vector<32x128xi1>
    %78 = vector.broadcast %cst_22 : f32 to vector<32x128xf32>
    %79 = arith.select %77, %78, %75 : vector<32x128xi1>, vector<32x128xf32>
    %80 = tpu.concatenate %74, %69, %79 in 1 : vector<32x128xf32>, vector<32x128xf32>, vector<32x128xf32> -> vector<32x384xf32>
    %81 = arith.truncf %80 : vector<32x384xf32> to vector<32x384xbf16>
    %c0_23 = arith.constant 0 : index
    %c0_24 = arith.constant 0 : index
    %82 = vector.load %arg3[%c0_23, %c0_24] : memref<384x128xbf16, #tpu.memory_space<vmem>>, vector<384x128xbf16>
    %cst_25 = arith.constant dense<0.000000e+00> : vector<32x128xf32>
    %83 = tpu.matmul %81, %82, %cst_25 {dimension_numbers = #tpu.dot_dimension_numbers<[1], [0], [0], [1], [0, 0, 1, 1], [], []>} : vector<32x384xbf16>, vector<384x128xbf16>, vector<32x128xf32> -> vector<32x128xf32>
    %84 = vector.broadcast %26 : vector<1x128xf32> to vector<32x128xf32>
    %85 = arith.addf %83, %84 : vector<32x128xf32>
    %cst_26 = arith.constant dense<0.000000e+00> : vector<128xf32>
    %86 = vector.multi_reduction <add>, %85, %cst_26 [0] : vector<32x128xf32> to vector<128xf32>
    %87 = vector.shape_cast %86 : vector<128xf32> to vector<1x128xf32>
    %88 = arith.mulf %85, %85 : vector<32x128xf32>
    %cst_27 = arith.constant dense<0.000000e+00> : vector<128xf32>
    %89 = vector.multi_reduction <add>, %88, %cst_27 [0] : vector<32x128xf32> to vector<128xf32>
    %90 = vector.shape_cast %89 : vector<128xf32> to vector<1x128xf32>
    %91 = tpu.concatenate %87, %90 in 0 : vector<1x128xf32>, vector<1x128xf32> -> vector<2x128xf32>
    %c0_28 = arith.constant 0 : index
    %c0_29 = arith.constant 0 : index
    %92 = vector.load %arg4[%c0_28, %c0_29] : memref<128x128xf32, #tpu.memory_space<vmem>>, vector<128x128xf32>
    %cst_30 = arith.constant dense<0.000000e+00> : vector<2x128xf32>
    %93 = tpu.matmul %91, %92, %cst_30 {dimension_numbers = #tpu.dot_dimension_numbers<[1], [0], [0], [1], [0, 0, 1, 1], [], []>} : vector<2x128xf32>, vector<128x128xf32>, vector<2x128xf32> -> vector<2x128xf32>
    %94 = vector.extract_strided_slice %93 {offsets = [0, 0], sizes = [1, 128], strides = [1, 1]} : vector<2x128xf32> to vector<1x128xf32>
    %95 = vector.extract_strided_slice %93 {offsets = [1, 0], sizes = [1, 128], strides = [1, 1]} : vector<2x128xf32> to vector<1x128xf32>
    %96 = arith.mulf %94, %94 : vector<1x128xf32>
    %97 = arith.subf %95, %96 : vector<1x128xf32>
    %98 = vector.broadcast %94 : vector<1x128xf32> to vector<32x128xf32>
    %99 = arith.subf %85, %98 : vector<32x128xf32>
    %cst_31 = arith.constant 9.99999974E-6 : f32
    %100 = vector.broadcast %cst_31 : f32 to vector<1x128xf32>
    %101 = arith.addf %97, %100 : vector<1x128xf32>
    %102 = math.rsqrt %101 : vector<1x128xf32>
    %103 = vector.broadcast %102 : vector<1x128xf32> to vector<32x128xf32>
    %104 = arith.mulf %99, %103 : vector<32x128xf32>
    %105 = vector.broadcast %27 : vector<1x128xf32> to vector<32x128xf32>
    %106 = arith.mulf %104, %105 : vector<32x128xf32>
    %107 = vector.broadcast %28 : vector<1x128xf32> to vector<32x128xf32>
    %108 = arith.addf %106, %107 : vector<32x128xf32>
    %109 = arith.truncf %0 : vector<32x64xf32> to vector<32x64xbf16>
    %c0_32 = arith.constant 0 : index
    %c0_33 = arith.constant 0 : index
    %110 = vector.load %arg6[%c0_32, %c0_33] : memref<64x128xbf16, #tpu.memory_space<vmem>>, vector<64x128xbf16>
    %cst_34 = arith.constant dense<0.000000e+00> : vector<32x128xf32>
    %111 = tpu.matmul %109, %110, %cst_34 {dimension_numbers = #tpu.dot_dimension_numbers<[1], [0], [0], [1], [0, 0, 1, 1], [], []>} : vector<32x64xbf16>, vector<64x128xbf16>, vector<32x128xf32> -> vector<32x128xf32>
    %112 = vector.extract_strided_slice %22 {offsets = [6, 0], sizes = [1, 128], strides = [1, 1]} : vector<8x128xf32> to vector<1x128xf32>
    %113 = vector.broadcast %112 : vector<1x128xf32> to vector<32x128xf32>
    %114 = arith.addf %111, %113 : vector<32x128xf32>
    %115 = arith.addf %108, %114 : vector<32x128xf32>
    %cst_35 = arith.constant 0.000000e+00 : f32
    %116 = vector.broadcast %cst_35 : f32 to vector<32x128xf32>
    %117 = arith.maximumf %115, %116 : vector<32x128xf32>
    %c0_36 = arith.constant 0 : index
    %c0_37 = arith.constant 0 : index
    %118 = vector.load %arg7[%c0_36, %c0_37] : memref<32x128xf32, #tpu.memory_space<vmem>>, vector<32x128xf32>
    tpu.vector_store %arg7[%c0_36, %c0_37], %117 {strides = array<i32>} : memref<32x128xf32, #tpu.memory_space<vmem>>, vector<32x128xf32>,
    return
  }
  func.func @transform_0(%arg0: i32) -> (i32, i32) {
    %c0_i32 = arith.constant 0 : i32
    %c0_i32_0 = arith.constant 0 : i32
    %c0_i32_1 = arith.constant 0 : i32
    return %c0_i32, %c0_i32_0 : i32, i32
  }
  func.func @transform_1(%arg0: i32) -> (i32, i32) {
    %c0_i32 = arith.constant 0 : i32
    %c0_i32_0 = arith.constant 0 : i32
    %c0_i32_1 = arith.constant 0 : i32
    return %c0_i32, %c0_i32_0 : i32, i32
  }
  func.func @transform_2(%arg0: i32) -> (i32, i32) {
    %c0_i32 = arith.constant 0 : i32
    %c0_i32_0 = arith.constant 0 : i32
    %c0_i32_1 = arith.constant 0 : i32
    return %c0_i32, %c0_i32_0 : i32, i32
  }
  func.func @transform_3(%arg0: i32) -> (i32, i32) {
    %c0_i32 = arith.constant 0 : i32
    %c0_i32_0 = arith.constant 0 : i32
    %c0_i32_1 = arith.constant 0 : i32
    return %c0_i32, %c0_i32_0 : i32, i32
  }
  func.func @transform_4(%arg0: i32) -> (i32, i32) {
    %c0_i32 = arith.constant 0 : i32
    %c0_i32_0 = arith.constant 0 : i32
    %c0_i32_1 = arith.constant 0 : i32
    return %c0_i32, %c0_i32_0 : i32, i32
  }
  func.func @transform_5(%arg0: i32) -> (i32, i32) {
    %c0_i32 = arith.constant 0 : i32
    %c0_i32_0 = arith.constant 0 : i32
    %c0_i32_1 = arith.constant 0 : i32
    return %c0_i32, %c0_i32_0 : i32, i32
  }
  func.func @transform_6(%arg0: i32) -> (i32, i32) {
    %c0_i32 = arith.constant 0 : i32
    %c0_i32_0 = arith.constant 0 : i32
    %c0_i32_1 = arith.constant 0 : i32
    return %c0_i32, %c0_i32_0 : i32, i32
  }
}

</mosaic_0001>

<llo_original>
// kernel: resnet_block_forward.1
$region0: #{resnet_block_forward.1}
  #allocation0 [shape = 'u32[]', space=smem, size = 0x4, offset = 0x4, fixed_abs, tag = 'smem constant byte address 0x4 - core index']
  #allocation1 [shape = 'u32[144,128]{1,0:T(1,128)}', space=vmem, size = 0x12000, scoped, tag = 'internal scratch']
  %s0 = inlined_call_operand.vmem [shape: f32[32,64], index: 0, kind: input, shape index: {}]
  %s1 = inlined_call_operand.vmem [shape: bf16[192,128], index: 1, kind: input, shape index: {}]
  %s2 = inlined_call_operand.vmem [shape: bf16[384,128], index: 2, kind: input, shape index: {}]
  %s3 = inlined_call_operand.vmem [shape: f32[128,128], index: 3, kind: input, shape index: {}]
  %s4 = inlined_call_operand.vmem [shape: f32[8,128], index: 4, kind: input, shape index: {}]
  %s5 = inlined_call_operand.vmem [shape: bf16[64,128], index: 5, kind: input, shape index: {}]
  %s6 = inlined_call_operand.vmem [shape: f32[32,128], index: 6, kind: output, shape index: {}]
  %s7 = sld [smem:[#allocation0]]
  $region34: #{resnet_block_forward.1} parent=0
    _
  %s9 = ssub.s32 1, %s7
  %s10 = scalar_select 0, %s9, %s7
  // Predicated region
  $region2: #{resnet_block_forward.1} parent=0 // pred_check
    _
  $region3: #{resnet_block_forward.1} parent=0 // pred_check_branch
    %12 = sbr.rel (0) target = $region5
  $region4: #{resnet_block_forward.1} parent=0 // pred_region
    _
  $region5: #{resnet_block_forward.1} parent=0 // pred_fallthru
    _
  // Predicated region
  $region6: #{resnet_block_forward.1} parent=0 // pred_check
    _
  $region7: #{resnet_block_forward.1} parent=0 // pred_check_branch
    %14 = sbr.rel (0) target = $region9
  $region8: #{resnet_block_forward.1} parent=0 // pred_region
    _
  $region9: #{resnet_block_forward.1} parent=0 // pred_fallthru
    _
  // Predicated region
  $region10: #{resnet_block_forward.1} parent=0 // pred_check
    _
  $region11: #{resnet_block_forward.1} parent=0 // pred_check_branch
    %16 = sbr.rel (0) target = $region13
  $region12: #{resnet_block_forward.1} parent=0 // pred_region
    _
  $region13: #{resnet_block_forward.1} parent=0 // pred_fallthru
    _
  // Predicated region
  $region14: #{resnet_block_forward.1} parent=0 // pred_check
    _
  $region15: #{resnet_block_forward.1} parent=0 // pred_check_branch
    %18 = sbr.rel (0) target = $region17
  $region16: #{resnet_block_forward.1} parent=0 // pred_region
    _
  $region17: #{resnet_block_forward.1} parent=0 // pred_fallthru
    _
  // Predicated region
  $region18: #{resnet_block_forward.1} parent=0 // pred_check
    _
  $region19: #{resnet_block_forward.1} parent=0 // pred_check_branch
    %20 = sbr.rel (0) target = $region21
  $region20: #{resnet_block_forward.1} parent=0 // pred_region
    _
  $region21: #{resnet_block_forward.1} parent=0 // pred_fallthru
    _
  // Predicated region
  $region22: #{resnet_block_forward.1} parent=0 // pred_check
    _
  $region23: #{resnet_block_forward.1} parent=0 // pred_check_branch
    %22 = sbr.rel (0) target = $region25
  $region24: #{resnet_block_forward.1} parent=0 // pred_region
    _
  $region25: #{resnet_block_forward.1} parent=0 // pred_fallthru
    _
  %v24 = vld [vmem:[%s0] sm:$0xff]
  %v25 = vld [vmem:[%s0 + $0x8] sm:$0xff]
  %v26 = vld [vmem:[%s0 + $0x10] sm:$0xff]
  %v27 = vld [vmem:[%s0 + $0x18] sm:$0xff]
  %v28 = vlaneseq
  %v29 = vshrl.u32 %v28, 7
  %v30 = vadd.s32 %v29, 8
  %v31 = vadd.s32 %v29, 16
  %v32 = vadd.s32 %v29, 24
  %vm33 = vcmp.lt.s32.totalorder %v29, 0
  %v34 = vsub.s32 0, %v29
  %v35 = vsel %vm33, %v34, %v29
  %v36 = vshrl.u32 %v35, 4
  %v37 = vand.u32 %v35, 15
  %v38 = vsub.s32 0, %v37
  %v39 = vsel %vm33, %v38, %v37
  %vm40 = vcmp.lt.s32.totalorder %v30, 0
  %v41 = vsub.s32 0, %v30
  %v42 = vsel %vm40, %v41, %v30
  %v43 = vshrl.u32 %v42, 4
  %v44 = vand.u32 %v42, 15
  %v45 = vsub.s32 0, %v44
  %v46 = vsel %vm40, %v45, %v44
  %vm47 = vcmp.lt.s32.totalorder %v31, 0
  %v48 = vsub.s32 0, %v31
  %v49 = vsel %vm47, %v48, %v31
  %v50 = vshrl.u32 %v49, 4
  %v51 = vand.u32 %v49, 15
  %v52 = vsub.s32 0, %v51
  %v53 = vsel %vm47, %v52, %v51
  %vm54 = vcmp.lt.s32.totalorder %v32, 0
  %v55 = vsub.s32 0, %v32
  %v56 = vsel %vm54, %v55, %v32
  %v57 = vshrl.u32 %v56, 4
  %v58 = vand.u32 %v56, 15
  %v59 = vsub.s32 0, %v58
  %v60 = vsel %vm54, %v59, %v58
  %vm61 = vcmp.ne.s32.totalorder %v39, 0
  %vm62 = vcmp.ne.s32.totalorder %v46, 0
  %vm63 = vcmp.ne.s32.totalorder %v53, 0
  %vm64 = vcmp.ne.s32.totalorder %v60, 0
  %vm65 = vcmp.lt.s32.totalorder %v39, 0
  %vm66 = vcmp.lt.s32.totalorder %v46, 0
  %vm67 = vcmp.lt.s32.totalorder %v53, 0
  %vm68 = vcmp.lt.s32.totalorder %v60, 0
  %vm69 = vmand %vm65, %vm61
  %vm70 = vmand %vm66, %vm62
  %vm71 = vmand %vm67, %vm63
  %vm72 = vmand %vm68, %vm64
  %v73 = vadd.s32 %v39, 16
  %v74 = vadd.s32 %v46, 16
  %v75 = vadd.s32 %v53, 16
  %v76 = vadd.s32 %v60, 16
  %v77 = vsel %vm69, %v73, %v39
  %v78 = vsel %vm70, %v74, %v46
  %v79 = vsel %vm71, %v75, %v53
  %v80 = vsel %vm72, %v76, %v60
  %vm81 = vcmp.eq.s32.totalorder %v77, 0
  %vm82 = vcmp.eq.s32.totalorder %v78, 0
  %vm83 = vcmp.eq.s32.totalorder %v79, 0
  %vm84 = vcmp.eq.s32.totalorder %v80, 0
  %vm85 = vcmp.eq.s32.totalorder %v77, 15
  %vm86 = vcmp.eq.s32.totalorder %v78, 15
  %vm87 = vcmp.eq.s32.totalorder %v79, 15
  %vm88 = vcmp.eq.s32.totalorder %v80, 15
  %v89 = vld [vmem:[%s4] sm:$0xff]
  %v90 = vrot.slane %v24, 7
  %v91 = vrot.slane %v25, 7
  %v92 = vrot.slane %v26, 7
  %v93 = vrot.slane %v27, 7
  %vm94 = vcmp.lt.s32.totalorder %v29, 1
  %v95 = vsel %vm94, %v92, %v93
  %v96 = vsel %vm94, %v91, %v92
  %v97 = vsel %vm94, %v90, %v91
  %v98 = vsel %vm94, %v93, %v90
  %v99 = vsel %vm81, 1, 0
  %v100 = vsel %vm82, 1, 0
  %v101 = vsel %vm83, 1, 0
  %v102 = vsel %vm84, 1, 0
  %vm103 = vcmp.eq.s32.totalorder %v99, 1
  %vm104 = vcmp.eq.s32.totalorder %v100, 1
  %vm105 = vcmp.eq.s32.totalorder %v101, 1
  %vm106 = vcmp.eq.s32.totalorder %v102, 1
  %v107 = vsel %vm103, 0.0, %v98
  %v108 = vsel %vm104, 0.0, %v97
  %v109 = vsel %vm105, 0.0, %v96
  %v110 = vsel %vm106, 0.0, %v95
  %v111 = vrot.slane %v24, 1
  %v112 = vrot.slane %v25, 1
  %v113 = vrot.slane %v26, 1
  %v114 = vrot.slane %v27, 1
  %vm115 = vcmp.lt.s32.totalorder %v29, 7
  %v116 = vsel %vm115, %v113, %v114
  %v117 = vsel %vm115, %v112, %v113
  %v118 = vsel %vm115, %v111, %v112
  %v119 = vsel %vm115, %v114, %v111
  %v120 = vsel %vm85, 1, 0
  %v121 = vsel %vm86, 1, 0
  %v122 = vsel %vm87, 1, 0
  %v123 = vsel %vm88, 1, 0
  %vm124 = vcmp.eq.s32.totalorder %v120, 1
  %vm125 = vcmp.eq.s32.totalorder %v121, 1
  %vm126 = vcmp.eq.s32.totalorder %v122, 1
  %vm127 = vcmp.eq.s32.totalorder %v123, 1
  %v128 = vsel %vm124, 0.0, %v118
  %v129 = vsel %vm125, 0.0, %v117
  %v130 = vsel %vm126, 0.0, %v116
  %v131 = vsel %vm127, 0.0, %v119
  %136 = vrot.lane.b32.xlu0 %v24, 64
  %v137 = vpop.permute.xlu0 %136
  %138 = vrot.lane.b32.xlu0 %v25, 64
  %v139 = vpop.permute.xlu0 %138
  %140 = vrot.lane.b32.xlu0 %v26, 64
  %v141 = vpop.permute.xlu0 %140
  %142 = vrot.lane.b32.xlu0 %v27, 64
  %v143 = vpop.permute.xlu0 %142
  %vm148 = vcmask 523264
  %v149 = vsel %vm148, %v107, %v137
  %v150 = vsel %vm148, %v108, %v139
  %v151 = vsel %vm148, %v109, %v141
  %v152 = vsel %vm148, %v110, %v143
  %v153 = vpack.c.bf16 %v150, %v149
  %v154 = vpack.c.bf16 %v129, %v128
  %v155 = vpack.c.bf16 %v152, %v151
  %v156 = vpack.c.bf16 %v131, %v130
  %v157 = vld [vmem:[%s1] sm:$0xf]
  %v158 = vld [vmem:[%s1 + $0x4] sm:$0xf]
  %v159 = vld [vmem:[%s1 + $0x8] sm:$0xf]
  %v160 = vld [vmem:[%s1 + $0xc] sm:$0xf]
  %v161 = vld [vmem:[%s1 + $0x10] sm:$0xf]
  %v162 = vld [vmem:[%s1 + $0x14] sm:$0xf]
  %v163 = vld [vmem:[%s1 + $0x18] sm:$0xf]
  %v164 = vld [vmem:[%s1 + $0x1c] sm:$0xf]
  %v165 = vld [vmem:[%s1 + $0x20] sm:$0xf]
  %v166 = vld [vmem:[%s1 + $0x24] sm:$0xf]
  %v167 = vld [vmem:[%s1 + $0x28] sm:$0xf]
  %v168 = vld [vmem:[%s1 + $0x2c] sm:$0xf]
  %v169 = vld [vmem:[%s1 + $0x30] sm:$0xf]
  %v170 = vld [vmem:[%s1 + $0x34] sm:$0xf]
  %v171 = vld [vmem:[%s1 + $0x38] sm:$0xf]
  %v172 = vld [vmem:[%s1 + $0x3c] sm:$0xf]
  %v173 = vld [vmem:[%s1 + $0x40] sm:$0xf]
  %v174 = vld [vmem:[%s1 + $0x44] sm:$0xf]
  %v175 = vld [vmem:[%s1 + $0x48] sm:$0xf]
  %v176 = vld [vmem:[%s1 + $0x4c] sm:$0xf]
  %v177 = vld [vmem:[%s1 + $0x50] sm:$0xf]
  %v178 = vld [vmem:[%s1 + $0x54] sm:$0xf]
  %v179 = vld [vmem:[%s1 + $0x58] sm:$0xf]
  %v180 = vld [vmem:[%s1 + $0x5c] sm:$0xf]
  %v181 = vlaneseq
  %v182 = vshrl.u32 %v181, 7
  %v183 = vsub.s32 0, %v182
  %v184 = vrot.slane %v89, %v183
  %v209 = vunpack.c.l.b16 %v157
  %v210 = vunpack.c.l.b16 %v158
  %v211 = vunpack.c.l.b16 %v159
  %v212 = vunpack.c.l.b16 %v160
  %v213 = vunpack.c.l.b16 %v161
  %v214 = vunpack.c.l.b16 %v162
  %v215 = vunpack.c.l.b16 %v163
  %v216 = vunpack.c.l.b16 %v164
  %v217 = vunpack.c.l.b16 %v165
  %v218 = vunpack.c.l.b16 %v166
  %v219 = vunpack.c.l.b16 %v167
  %v220 = vunpack.c.l.b16 %v168
  %v221 = vunpack.c.l.b16 %v169
  %v222 = vunpack.c.l.b16 %v170
  %v223 = vunpack.c.l.b16 %v171
  %v224 = vunpack.c.l.b16 %v172
  %v225 = vunpack.c.l.b16 %v173
  %v226 = vunpack.c.l.b16 %v174
  %v227 = vunpack.c.l.b16 %v175
  %v228 = vunpack.c.l.b16 %v176
  %v229 = vunpack.c.l.b16 %v177
  %v230 = vunpack.c.l.b16 %v178
  %v231 = vunpack.c.l.b16 %v179
  %v232 = vunpack.c.l.b16 %v180
  %v233 = vpack.c.b16 %v210, %v209
  %v234 = vpack.c.b16 %v212, %v211
  %v235 = vpack.c.b16 %v214, %v213
  %v236 = vpack.c.b16 %v216, %v215
  %v237 = vpack.c.b16 %v218, %v217
  %v238 = vpack.c.b16 %v220, %v219
  %v239 = vpack.c.b16 %v222, %v221
  %v240 = vpack.c.b16 %v224, %v223
  %v241 = vpack.c.b16 %v226, %v225
  %v242 = vpack.c.b16 %v228, %v227
  %v243 = vpack.c.b16 %v230, %v229
  %v244 = vpack.c.b16 %v232, %v231
  %v258 = vsel %vm148, %v154, 0
  %v261 = vsel %vm148, %v156, 0
  %263 = vmatprep.subr.bf16.mxu0 0
  %264 = vmatpush1.bf16.msra.mxu0 %v240
  %265 = vmatprep.subr.bf16.mxu0 0
  %266 = vmatpush1.bf16.msra.mxu0 %v239
  %267 = vmatprep.subr.bf16.mxu0 0
  %268 = vmatpush1.bf16.msra.mxu0 %v238
  %269 = vmatprep.subr.bf16.mxu0 0
  %270 = vmatpush1.bf16.msra.mxu0 %v237
  %271 = vmatprep.subr.bf16.mxu0 0
  %272 = vmatpush1.bf16.msra.mxu0 %v236
  %273 = vmatprep.subr.bf16.mxu0 0
  %274 = vmatpush1.bf16.msra.mxu0 %v235
  %275 = vmatprep.subr.bf16.mxu0 0
  %276 = vmatpush1.bf16.msra.mxu0 %v234
  %277 = vmatprep.subr.bf16.mxu0 0
  %278 = vmatpush1.bf16.msra.mxu0 %v233
  %279 = vmatprep.subr.bf16.mxu0 0
  %280 = vmatpush2.bf16.msra.mxu0 0
  %281 = vmatprep.subr.bf16.mxu0 0
  %282 = vmatpush2.bf16.msra.mxu0 0
  %283 = vmatprep.subr.bf16.mxu0 0
  %284 = vmatpush2.bf16.msra.mxu0 0
  %285 = vmatprep.subr.bf16.mxu0 0
  %286 = vmatpush2.bf16.msra.mxu0 0
  %287 = vmatprep.subr.bf16.mxu0 0
  %288 = vmatpush2.bf16.msra.mxu0 %v244
  %289 = vmatprep.subr.bf16.mxu0 0
  %290 = vmatpush2.bf16.msra.mxu0 %v243
  %291 = vmatprep.subr.bf16.mxu0 0
  %292 = vmatpush2.bf16.msra.mxu0 %v242
  %293 = vmatprep.subr.bf16.mxu0 0
  %294 = vmatpush2.bf16.msra.mxu0 %v241
  %295 = vmatprep.mubr.bf16.mxu0 %v258
  %296 = vmatmul.mubr.bf16.gmra.mxu0 %v153
  %v297 = vpop.f32.mrf.mxu0
  %v298 = vadd.f32 %v184, %v297
  %v299 = vpop.f32.mrf.mxu0
  %v300 = vpop.f32.mrf.mxu0
  %v301 = vadd.f32 %v184, %v300
  %v302 = vpop.f32.mrf.mxu0
  %303 = vmatprep.mubr.bf16.mxu0 %v261
  %304 = vmatmul.mubr.bf16.gmra.mxu0 %v155
  %v305 = vpop.f32.mrf.mxu0
  %v306 = vadd.f32 %v184, %v305
  %v307 = vpop.f32.mrf.mxu0
  %v308 = vpop.f32.mrf.mxu0
  %v309 = vadd.f32 %v184, %v308
  %v310 = vpop.f32.mrf.mxu0
  %311 = vdwg.mxu0
  %v312 = vadd.f32 %v298, %v301
  %v313 = vadd.f32 %v312, %v306
  %v314 = vadd.f32 %v313, %v309
  %v315 = vrot.slane %v314, 4
  %v316 = vadd.f32 %v314, %v315
  %v317 = vrot.slane %v316, 2
  %v318 = vadd.f32 %v316, %v317
  %v319 = vrot.slane %v318, 1
  %v320 = vadd.f32 %v318, %v319
  %v321 = vmul.f32 %v298, %v298
  %v322 = vmul.f32 %v301, %v301
  %v323 = vmul.f32 %v306, %v306
  %v324 = vmul.f32 %v309, %v309
  %v325 = vadd.f32 %v321, %v322
  %v326 = vadd.f32 %v325, %v323
  %v327 = vadd.f32 %v326, %v324
  %v328 = vrot.slane %v327, 4
  %v329 = vadd.f32 %v327, %v328
  %v330 = vrot.slane %v329, 2
  %v331 = vadd.f32 %v329, %v330
  %v332 = vrot.slane %v331, 1
  %v333 = vadd.f32 %v331, %v332
  %vm334 = vcmask 1040384
  %v335 = vsel %vm334, %v320, %v333
  %v336 = vld [vmem:[%s3] sm:$0xff]
  %v337 = vld [vmem:[%s3 + $0x8] sm:$0xff]
  %v338 = vld [vmem:[%s3 + $0x10] sm:$0xff]
  %v339 = vld [vmem:[%s3 + $0x18] sm:$0xff]
  %v340 = vld [vmem:[%s3 + $0x20] sm:$0xff]
  %v341 = vld [vmem:[%s3 + $0x28] sm:$0xff]
  %v342 = vld [vmem:[%s3 + $0x30] sm:$0xff]
  %v343 = vld [vmem:[%s3 + $0x38] sm:$0xff]
  %v344 = vld [vmem:[%s3 + $0x40] sm:$0xff]
  %v345 = vld [vmem:[%s3 + $0x48] sm:$0xff]
  %v346 = vld [vmem:[%s3 + $0x50] sm:$0xff]
  %v347 = vld [vmem:[%s3 + $0x58] sm:$0xff]
  %v348 = vld [vmem:[%s3 + $0x60] sm:$0xff]
  %v349 = vld [vmem:[%s3 + $0x68] sm:$0xff]
  %v350 = vld [vmem:[%s3 + $0x70] sm:$0xff]
  %v351 = vld [vmem:[%s3 + $0x78] sm:$0xff]
  %352 = vmatprep.subr.mxu0 0.0
  %353 = vmatpush1.msra.mxu0 %v351
  %354 = vmatprep.subr.mxu0 0.0
  %355 = vmatpush1.msra.mxu0 %v350
  %356 = vmatprep.subr.mxu0 0.0
  %357 = vmatpush1.msra.mxu0 %v349
  %358 = vmatprep.subr.mxu0 0.0
  %359 = vmatpush1.msra.mxu0 %v348
  %360 = vmatprep.subr.mxu0 0.0
  %361 = vmatpush1.msra.mxu0 %v347
  %362 = vmatprep.subr.mxu0 0.0
  %363 = vmatpush1.msra.mxu0 %v346
  %364 = vmatprep.subr.mxu0 0.0
  %365 = vmatpush1.msra.mxu0 %v345
  %366 = vmatprep.subr.mxu0 0.0
  %367 = vmatpush1.msra.mxu0 %v344
  %368 = vmatprep.subr.mxu0 0.0
  %369 = vmatpush1.msra.mxu0 %v343
  %370 = vmatprep.subr.mxu0 0.0
  %371 = vmatpush1.msra.mxu0 %v342
  %372 = vmatprep.subr.mxu0 0.0
  %373 = vmatpush1.msra.mxu0 %v341
  %374 = vmatprep.subr.mxu0 0.0
  %375 = vmatpush1.msra.mxu0 %v340
  %376 = vmatprep.subr.mxu0 0.0
  %377 = vmatpush1.msra.mxu0 %v339
  %378 = vmatprep.subr.mxu0 0.0
  %379 = vmatpush1.msra.mxu0 %v338
  %380 = vmatprep.subr.mxu0 0.0
  %381 = vmatpush1.msra.mxu0 %v337
  %382 = vmatprep.subr.mxu0 0.0
  %383 = vmatpush1.msra.mxu0 %v336
  %384 = vmatprep.subr.mxu0 0.0
  %385 = vmatpush2.msra.mxu0 0.0
  %386 = vmatprep.subr.mxu0 0.0
  %387 = vmatpush2.msra.mxu0 0.0
  %388 = vmatprep.subr.mxu0 0.0
  %389 = vmatpush2.msra.mxu0 0.0
  %390 = vmatprep.subr.mxu0 0.0
  %391 = vmatpush2.msra.mxu0 0.0
  %392 = vmatprep.subr.mxu0 0.0
  %393 = vmatpush2.msra.mxu0 0.0
  %394 = vmatprep.subr.mxu0 0.0
  %395 = vmatpush2.msra.mxu0 0.0
  %396 = vmatprep.subr.mxu0 0.0
  %397 = vmatpush2.msra.mxu0 0.0
  %398 = vmatprep.subr.mxu0 0.0
  %399 = vmatpush2.msra.mxu0 0.0
  %400 = vmatprep.subr.mxu0 0.0
  %401 = vmatpush2.msra.mxu0 0.0
  %402 = vmatprep.subr.mxu0 0.0
  %403 = vmatpush2.msra.mxu0 0.0
  %404 = vmatprep.subr.mxu0 0.0
  %405 = vmatpush2.msra.mxu0 0.0
  %406 = vmatprep.subr.mxu0 0.0
  %407 = vmatpush2.msra.mxu0 0.0
  %408 = vmatprep.subr.mxu0 0.0
  %409 = vmatpush2.msra.mxu0 0.0
  %410 = vmatprep.subr.mxu0 0.0
  %411 = vmatpush2.msra.mxu0 0.0
  %412 = vmatprep.subr.mxu0 0.0
  %413 = vmatpush2.msra.mxu0 0.0
  %414 = vmatprep.subr.mxu0 0.0
  %415 = vmatpush2.msra.mxu0 0.0
  %416 = vmatprep.mubr.f32.mxu0 0.0
  %417 = vmatmul.mubr.f32.gmra.mxu0 %v335
  %v418 = vpop.f32.mrf.mxu0
  %v419 = vadd.f32 0.0, %v418
  %v420 = vpop.f32.mrf.mxu0
  %421 = vdwg.mxu0
  %v422 = vmul.f32 %v419, %v419
  %v424 = vrot.slane %v422, 7
  %v426 = vsub.f32 %v419, %v424
  %v427 = vlaneseq
  %v428 = vshrl.u32 %v427, 7
  %v429 = vsub.s32 0, %v428
  %v430 = vrot.slane %v419, %v429
  %v431 = vsub.f32 %v298, %v430
  %v432 = vsub.f32 %v301, %v430
  %v433 = vsub.f32 %v306, %v430
  %v434 = vsub.f32 %v309, %v430
  %v435 = vadd.f32 %v426, 1e-05
  %v436 = vrsqrt.pop %v435
  %v437 = vlaneseq
  %v438 = vshrl.u32 %v437, 7
  %v439 = vsub.s32 1, %v438
  %v440 = vrot.slane %v436, %v439
  %v441 = vmul.f32 %v431, %v440
  %v442 = vmul.f32 %v432, %v440
  %v443 = vmul.f32 %v433, %v440
  %v444 = vmul.f32 %v434, %v440
  %v445 = vlaneseq
  %v446 = vshrl.u32 %v445, 7
  %v447 = vsub.s32 1, %v446
  %v448 = vrot.slane %v89, %v447
  %v449 = vmul.f32 %v441, %v448
  %v450 = vmul.f32 %v442, %v448
  %v451 = vmul.f32 %v443, %v448
  %v452 = vmul.f32 %v444, %v448
  %v453 = vlaneseq
  %v454 = vshrl.u32 %v453, 7
  %v455 = vsub.s32 2, %v454
  %v456 = vrot.slane %v89, %v455
  %v457 = vadd.f32 %v449, %v456
  %v458 = vadd.f32 %v450, %v456
  %v459 = vadd.f32 %v451, %v456
  %v460 = vadd.f32 %v452, %v456
  %v461 = vmax.f32 %v457, 0.0
  %v462 = vmax.f32 %v458, 0.0
  %v463 = vmax.f32 %v459, 0.0
  %v464 = vmax.f32 %v460, 0.0
  %v465 = vrot.slane %v461, 7
  %v466 = vrot.slane %v462, 7
  %v467 = vrot.slane %v463, 7
  %v468 = vrot.slane %v464, 7
  %v469 = vsel %vm94, %v467, %v468
  %v470 = vsel %vm94, %v466, %v467
  %v471 = vsel %vm94, %v465, %v466
  %v472 = vsel %vm94, %v468, %v465
  %v473 = vsel %vm103, 0.0, %v472
  %v474 = vsel %vm104, 0.0, %v471
  %v475 = vsel %vm105, 0.0, %v470
  %v476 = vsel %vm106, 0.0, %v469
  %v477 = vrot.slane %v461, 1
  %v478 = vrot.slane %v462, 1
  %v479 = vrot.slane %v463, 1
  %v480 = vrot.slane %v464, 1
  %v481 = vsel %vm115, %v479, %v480
  %v482 = vsel %vm115, %v478, %v479
  %v483 = vsel %vm115, %v477, %v478
  %v484 = vsel %vm115, %v480, %v477
  %v485 = vsel %vm124, 0.0, %v483
  %v486 = vsel %vm125, 0.0, %v482
  %v487 = vsel %vm126, 0.0, %v481
  %v488 = vsel %vm127, 0.0, %v484
  %v489 = vpack.c.bf16 %v474, %v473
  %v490 = vpack.c.bf16 %v462, %v461
  %v491 = vpack.c.bf16 %v486, %v485
  %v492 = vpack.c.bf16 %v476, %v475
  %v493 = vpack.c.bf16 %v464, %v463
  %v494 = vpack.c.bf16 %v488, %v487
  %v495 = vld [vmem:[%s2] sm:$0xf]
  %v496 = vld [vmem:[%s2 + $0x4] sm:$0xf]
  %v497 = vld [vmem:[%s2 + $0x8] sm:$0xf]
  %v498 = vld [vmem:[%s2 + $0xc] sm:$0xf]
  %v499 = vld [vmem:[%s2 + $0x10] sm:$0xf]
  %v500 = vld [vmem:[%s2 + $0x14] sm:$0xf]
  %v501 = vld [vmem:[%s2 + $0x18] sm:$0xf]
  %v502 = vld [vmem:[%s2 + $0x1c] sm:$0xf]
  %v503 = vld [vmem:[%s2 + $0x20] sm:$0xf]
  %v504 = vld [vmem:[%s2 + $0x24] sm:$0xf]
  %v505 = vld [vmem:[%s2 + $0x28] sm:$0xf]
  %v506 = vld [vmem:[%s2 + $0x2c] sm:$0xf]
  %v507 = vld [vmem:[%s2 + $0x30] sm:$0xf]
  %v508 = vld [vmem:[%s2 + $0x34] sm:$0xf]
  %v509 = vld [vmem:[%s2 + $0x38] sm:$0xf]
  %v510 = vld [vmem:[%s2 + $0x3c] sm:$0xf]
  %v511 = vld [vmem:[%s2 + $0x40] sm:$0xf]
  %v512 = vld [vmem:[%s2 + $0x44] sm:$0xf]
  %v513 = vld [vmem:[%s2 + $0x48] sm:$0xf]
  %v514 = vld [vmem:[%s2 + $0x4c] sm:$0xf]
  %v515 = vld [vmem:[%s2 + $0x50] sm:$0xf]
  %v516 = vld [vmem:[%s2 + $0x54] sm:$0xf]
  %v517 = vld [vmem:[%s2 + $0x58] sm:$0xf]
  %v518 = vld [vmem:[%s2 + $0x5c] sm:$0xf]
  %v519 = vld [vmem:[%s2 + $0x60] sm:$0xf]
  %v520 = vld [vmem:[%s2 + $0x64] sm:$0xf]
  %v521 = vld [vmem:[%s2 + $0x68] sm:$0xf]
  %v522 = vld [vmem:[%s2 + $0x6c] sm:$0xf]
  %v523 = vld [vmem:[%s2 + $0x70] sm:$0xf]
  %v524 = vld [vmem:[%s2 + $0x74] sm:$0xf]
  %v525 = vld [vmem:[%s2 + $0x78] sm:$0xf]
  %v526 = vld [vmem:[%s2 + $0x7c] sm:$0xf]
  %v527 = vld [vmem:[%s2 + $0x80] sm:$0xf]
  %v528 = vld [vmem:[%s2 + $0x84] sm:$0xf]
  %v529 = vld [vmem:[%s2 + $0x88] sm:$0xf]
  %v530 = vld [vmem:[%s2 + $0x8c] sm:$0xf]
  %v531 = vld [vmem:[%s2 + $0x90] sm:$0xf]
  %v532 = vld [vmem:[%s2 + $0x94] sm:$0xf]
  %v533 = vld [vmem:[%s2 + $0x98] sm:$0xf]
  %v534 = vld [vmem:[%s2 + $0x9c] sm:$0xf]
  %v535 = vld [vmem:[%s2 + $0xa0] sm:$0xf]
  %v536 = vld [vmem:[%s2 + $0xa4] sm:$0xf]
  %v537 = vld [vmem:[%s2 + $0xa8] sm:$0xf]
  %v538 = vld [vmem:[%s2 + $0xac] sm:$0xf]
  %v539 = vld [vmem:[%s2 + $0xb0] sm:$0xf]
  %v540 = vld [vmem:[%s2 + $0xb4] sm:$0xf]
  %v541 = vld [vmem:[%s2 + $0xb8] sm:$0xf]
  %v542 = vld [vmem:[%s2 + $0xbc] sm:$0xf]
  %v543 = vlaneseq
  %v544 = vshrl.u32 %v543, 7
  %v545 = vsub.s32 3, %v544
  %v546 = vrot.slane %v89, %v545
  %v595 = vunpack.c.l.b16 %v495
  %v596 = vunpack.c.l.b16 %v496
  %v597 = vunpack.c.l.b16 %v497
  %v598 = vunpack.c.l.b16 %v498
  %v599 = vunpack.c.l.b16 %v499
  %v600 = vunpack.c.l.b16 %v500
  %v601 = vunpack.c.l.b16 %v501
  %v602 = vunpack.c.l.b16 %v502
  %v603 = vunpack.c.l.b16 %v503
  %v604 = vunpack.c.l.b16 %v504
  %v605 = vunpack.c.l.b16 %v505
  %v606 = vunpack.c.l.b16 %v506
  %v607 = vunpack.c.l.b16 %v507
  %v608 = vunpack.c.l.b16 %v508
  %v609 = vunpack.c.l.b16 %v509
  %v610 = vunpack.c.l.b16 %v510
  %v611 = vunpack.c.l.b16 %v511
  %v612 = vunpack.c.l.b16 %v512
  %v613 = vunpack.c.l.b16 %v513
  %v614 = vunpack.c.l.b16 %v514
  %v615 = vunpack.c.l.b16 %v515
  %v616 = vunpack.c.l.b16 %v516
  %v617 = vunpack.c.l.b16 %v517
  %v618 = vunpack.c.l.b16 %v518
  %v619 = vunpack.c.l.b16 %v519
  %v620 = vunpack.c.l.b16 %v520
  %v621 = vunpack.c.l.b16 %v521
  %v622 = vunpack.c.l.b16 %v522
  %v623 = vunpack.c.l.b16 %v523
  %v624 = vunpack.c.l.b16 %v524
  %v625 = vunpack.c.l.b16 %v525
  %v626 = vunpack.c.l.b16 %v526
  %v627 = vunpack.c.l.b16 %v527
  %v628 = vunpack.c.l.b16 %v528
  %v629 = vunpack.c.l.b16 %v529
  %v630 = vunpack.c.l.b16 %v530
  %v631 = vunpack.c.l.b16 %v531
  %v632 = vunpack.c.l.b16 %v532
  %v633 = vunpack.c.l.b16 %v533
  %v634 = vunpack.c.l.b16 %v534
  %v635 = vunpack.c.l.b16 %v535
  %v636 = vunpack.c.l.b16 %v536
  %v637 = vunpack.c.l.b16 %v537
  %v638 = vunpack.c.l.b16 %v538
  %v639 = vunpack.c.l.b16 %v539
  %v640 = vunpack.c.l.b16 %v540
  %v641 = vunpack.c.l.b16 %v541
  %v642 = vunpack.c.l.b16 %v542
  %v643 = vpack.c.b16 %v596, %v595
  %v644 = vpack.c.b16 %v598, %v597
  %v645 = vpack.c.b16 %v600, %v599
  %v646 = vpack.c.b16 %v602, %v601
  %v647 = vpack.c.b16 %v604, %v603
  %v648 = vpack.c.b16 %v606, %v605
  %v649 = vpack.c.b16 %v608, %v607
  %v650 = vpack.c.b16 %v610, %v609
  %v651 = vpack.c.b16 %v612, %v611
  %v652 = vpack.c.b16 %v614, %v613
  %v653 = vpack.c.b16 %v616, %v615
  %v654 = vpack.c.b16 %v618, %v617
  %v655 = vpack.c.b16 %v620, %v619
  %v656 = vpack.c.b16 %v622, %v621
  %v657 = vpack.c.b16 %v624, %v623
  %v658 = vpack.c.b16 %v626, %v625
  %v659 = vpack.c.b16 %v628, %v627
  %v660 = vpack.c.b16 %v630, %v629
  %v661 = vpack.c.b16 %v632, %v631
  %v662 = vpack.c.b16 %v634, %v633
  %v663 = vpack.c.b16 %v636, %v635
  %v664 = vpack.c.b16 %v638, %v637
  %v665 = vpack.c.b16 %v640, %v639
  %v666 = vpack.c.b16 %v642, %v641
  %691 = vmatprep.subr.bf16.mxu0 0
  %692 = vmatpush1.bf16.msra.mxu0 %v650
  %693 = vmatprep.subr.bf16.mxu0 0
  %694 = vmatpush1.bf16.msra.mxu0 %v649
  %695 = vmatprep.subr.bf16.mxu0 0
  %696 = vmatpush1.bf16.msra.mxu0 %v648
  %697 = vmatprep.subr.bf16.mxu0 0
  %698 = vmatpush1.bf16.msra.mxu0 %v647
  %699 = vmatprep.subr.bf16.mxu0 0
  %700 = vmatpush1.bf16.msra.mxu0 %v646
  %701 = vmatprep.subr.bf16.mxu0 0
  %702 = vmatpush1.bf16.msra.mxu0 %v645
  %703 = vmatprep.subr.bf16.mxu0 0
  %704 = vmatpush1.bf16.msra.mxu0 %v644
  %705 = vmatprep.subr.bf16.mxu0 0
  %706 = vmatpush1.bf16.msra.mxu0 %v643
  %707 = vmatprep.subr.bf16.mxu0 0
  %708 = vmatpush2.bf16.msra.mxu0 %v658
  %709 = vmatprep.subr.bf16.mxu0 0
  %710 = vmatpush2.bf16.msra.mxu0 %v657
  %711 = vmatprep.subr.bf16.mxu0 0
  %712 = vmatpush2.bf16.msra.mxu0 %v656
  %713 = vmatprep.subr.bf16.mxu0 0
  %714 = vmatpush2.bf16.msra.mxu0 %v655
  %715 = vmatprep.subr.bf16.mxu0 0
  %716 = vmatpush2.bf16.msra.mxu0 %v654
  %717 = vmatprep.subr.bf16.mxu0 0
  %718 = vmatpush2.bf16.msra.mxu0 %v653
  %719 = vmatprep.subr.bf16.mxu0 0
  %720 = vmatpush2.bf16.msra.mxu0 %v652
  %721 = vmatprep.subr.bf16.mxu0 0
  %722 = vmatpush2.bf16.msra.mxu0 %v651
  %723 = vmatprep.mubr.bf16.mxu0 %v490
  %724 = vmatmul.mubr.bf16.gmra.mxu0 %v489
  %v725 = vpop.f32.mrf.mxu0
  %v726 = vadd.f32 %v546, %v725
  %v727 = vpop.f32.mrf.mxu0
  %v728 = vpop.f32.mrf.mxu0
  %v729 = vadd.f32 %v546, %v728
  %v730 = vpop.f32.mrf.mxu0
  %731 = vmatprep.mubr.bf16.mxu0 %v493
  %732 = vmatmul.mubr.bf16.gmra.mxu0 %v492
  %v733 = vpop.f32.mrf.mxu0
  %v734 = vadd.f32 %v546, %v733
  %v735 = vpop.f32.mrf.mxu0
  %v736 = vpop.f32.mrf.mxu0
  %v737 = vadd.f32 %v546, %v736
  %v738 = vpop.f32.mrf.mxu0
  %739 = vdwg.mxu0
  %740 = vmatprep.subr.bf16.mxu0 0
  %741 = vmatpush1.bf16.msra.mxu0 %v666
  %742 = vmatprep.subr.bf16.mxu0 0
  %743 = vmatpush1.bf16.msra.mxu0 %v665
  %744 = vmatprep.subr.bf16.mxu0 0
  %745 = vmatpush1.bf16.msra.mxu0 %v664
  %746 = vmatprep.subr.bf16.mxu0 0
  %747 = vmatpush1.bf16.msra.mxu0 %v663
  %748 = vmatprep.subr.bf16.mxu0 0
  %749 = vmatpush1.bf16.msra.mxu0 %v662
  %750 = vmatprep.subr.bf16.mxu0 0
  %751 = vmatpush1.bf16.msra.mxu0 %v661
  %752 = vmatprep.subr.bf16.mxu0 0
  %753 = vmatpush1.bf16.msra.mxu0 %v660
  %754 = vmatprep.subr.bf16.mxu0 0
  %755 = vmatpush1.bf16.msra.mxu0 %v659
  %756 = vmatprep.subr.bf16.mxu0 0
  %757 = vmatpush2.bf16.msra.mxu0 0
  %758 = vmatprep.subr.bf16.mxu0 0
  %759 = vmatpush2.bf16.msra.mxu0 0
  %760 = vmatprep.subr.bf16.mxu0 0
  %761 = vmatpush2.bf16.msra.mxu0 0
  %762 = vmatprep.subr.bf16.mxu0 0
  %763 = vmatpush2.bf16.msra.mxu0 0
  %764 = vmatprep.subr.bf16.mxu0 0
  %765 = vmatpush2.bf16.msra.mxu0 0
  %766 = vmatprep.subr.bf16.mxu0 0
  %767 = vmatpush2.bf16.msra.mxu0 0
  %768 = vmatprep.subr.bf16.mxu0 0
  %769 = vmatpush2.bf16.msra.mxu0 0
  %770 = vmatprep.subr.bf16.mxu0 0
  %771 = vmatpush2.bf16.msra.mxu0 0
  %772 = vmatprep.mubr.bf16.mxu0 0
  %773 = vmatmul.mubr.bf16.gmra.mxu0 %v491
  %v774 = vpop.f32.mrf.mxu0
  %v775 = vadd.f32 %v726, %v774
  %v776 = vpop.f32.mrf.mxu0
  %v777 = vpop.f32.mrf.mxu0
  %v778 = vadd.f32 %v729, %v777
  %v779 = vpop.f32.mrf.mxu0
  %780 = vmatprep.mubr.bf16.mxu0 0
  %781 = vmatmul.mubr.bf16.gmra.mxu0 %v494
  %v782 = vpop.f32.mrf.mxu0
  %v783 = vadd.f32 %v734, %v782
  %v784 = vpop.f32.mrf.mxu0
  %v785 = vpop.f32.mrf.mxu0
  %v786 = vadd.f32 %v737, %v785
  %v787 = vpop.f32.mrf.mxu0
  %788 = vdwg.mxu0
  %v789 = vadd.f32 %v775, %v778
  %v790 = vadd.f32 %v789, %v783
  %v791 = vadd.f32 %v790, %v786
  %v792 = vrot.slane %v791, 4
  %v793 = vadd.f32 %v791, %v792
  %v794 = vrot.slane %v793, 2
  %v795 = vadd.f32 %v793, %v794
  %v796 = vrot.slane %v795, 1
  %v797 = vadd.f32 %v795, %v796
  %v798 = vmul.f32 %v775, %v775
  %v799 = vmul.f32 %v778, %v778
  %v800 = vmul.f32 %v783, %v783
  %v801 = vmul.f32 %v786, %v786
  %v802 = vadd.f32 %v798, %v799
  %v803 = vadd.f32 %v802, %v800
  %v804 = vadd.f32 %v803, %v801
  %v805 = vrot.slane %v804, 4
  %v806 = vadd.f32 %v804, %v805
  %v807 = vrot.slane %v806, 2
  %v808 = vadd.f32 %v806, %v807
  %v809 = vrot.slane %v808, 1
  %v810 = vadd.f32 %v808, %v809
  %v811 = vsel %vm334, %v797, %v810
  %812 = vmatprep.subr.mxu0 0.0
  %813 = vmatpush1.msra.mxu0 %v351
  %814 = vmatprep.subr.mxu0 0.0
  %815 = vmatpush1.msra.mxu0 %v350
  %816 = vmatprep.subr.mxu0 0.0
  %817 = vmatpush1.msra.mxu0 %v349
  %818 = vmatprep.subr.mxu0 0.0
  %819 = vmatpush1.msra.mxu0 %v348
  %820 = vmatprep.subr.mxu0 0.0
  %821 = vmatpush1.msra.mxu0 %v347
  %822 = vmatprep.subr.mxu0 0.0
  %823 = vmatpush1.msra.mxu0 %v346
  %824 = vmatprep.subr.mxu0 0.0
  %825 = vmatpush1.msra.mxu0 %v345
  %826 = vmatprep.subr.mxu0 0.0
  %827 = vmatpush1.msra.mxu0 %v344
  %828 = vmatprep.subr.mxu0 0.0
  %829 = vmatpush1.msra.mxu0 %v343
  %830 = vmatprep.subr.mxu0 0.0
  %831 = vmatpush1.msra.mxu0 %v342
  %832 = vmatprep.subr.mxu0 0.0
  %833 = vmatpush1.msra.mxu0 %v341
  %834 = vmatprep.subr.mxu0 0.0
  %835 = vmatpush1.msra.mxu0 %v340
  %836 = vmatprep.subr.mxu0 0.0
  %837 = vmatpush1.msra.mxu0 %v339
  %838 = vmatprep.subr.mxu0 0.0
  %839 = vmatpush1.msra.mxu0 %v338
  %840 = vmatprep.subr.mxu0 0.0
  %841 = vmatpush1.msra.mxu0 %v337
  %842 = vmatprep.subr.mxu0 0.0
  %843 = vmatpush1.msra.mxu0 %v336
  %844 = vmatprep.subr.mxu0 0.0
  %845 = vmatpush2.msra.mxu0 0.0
  %846 = vmatprep.subr.mxu0 0.0
  %847 = vmatpush2.msra.mxu0 0.0
  %848 = vmatprep.subr.mxu0 0.0
  %849 = vmatpush2.msra.mxu0 0.0
  %850 = vmatprep.subr.mxu0 0.0
  %851 = vmatpush2.msra.mxu0 0.0
  %852 = vmatprep.subr.mxu0 0.0
  %853 = vmatpush2.msra.mxu0 0.0
  %854 = vmatprep.subr.mxu0 0.0
  %855 = vmatpush2.msra.mxu0 0.0
  %856 = vmatprep.subr.mxu0 0.0
  %857 = vmatpush2.msra.mxu0 0.0
  %858 = vmatprep.subr.mxu0 0.0
  %859 = vmatpush2.msra.mxu0 0.0
  %860 = vmatprep.subr.mxu0 0.0
  %861 = vmatpush2.msra.mxu0 0.0
  %862 = vmatprep.subr.mxu0 0.0
  %863 = vmatpush2.msra.mxu0 0.0
  %864 = vmatprep.subr.mxu0 0.0
  %865 = vmatpush2.msra.mxu0 0.0
  %866 = vmatprep.subr.mxu0 0.0
  %867 = vmatpush2.msra.mxu0 0.0
  %868 = vmatprep.subr.mxu0 0.0
  %869 = vmatpush2.msra.mxu0 0.0
  %870 = vmatprep.subr.mxu0 0.0
  %871 = vmatpush2.msra.mxu0 0.0
  %872 = vmatprep.subr.mxu0 0.0
  %873 = vmatpush2.msra.mxu0 0.0
  %874 = vmatprep.subr.mxu0 0.0
  %875 = vmatpush2.msra.mxu0 0.0
  %876 = vmatprep.mubr.f32.mxu0 0.0
  %877 = vmatmul.mubr.f32.gmra.mxu0 %v811
  %v878 = vpop.f32.mrf.mxu0
  %v879 = vadd.f32 0.0, %v878
  %v880 = vpop.f32.mrf.mxu0
  %881 = vdwg.mxu0
  %v882 = vmul.f32 %v879, %v879
  %v884 = vrot.slane %v882, 7
  %v886 = vsub.f32 %v879, %v884
  %v887 = vlaneseq
  %v888 = vshrl.u32 %v887, 7
  %v889 = vsub.s32 0, %v888
  %v890 = vrot.slane %v879, %v889
  %v891 = vsub.f32 %v775, %v890
  %v892 = vsub.f32 %v778, %v890
  %v893 = vsub.f32 %v783, %v890
  %v894 = vsub.f32 %v786, %v890
  %v895 = vadd.f32 %v886, 1e-05
  %v896 = vrsqrt.pop %v895
  %v897 = vlaneseq
  %v898 = vshrl.u32 %v897, 7
  %v899 = vsub.s32 1, %v898
  %v900 = vrot.slane %v896, %v899
  %v901 = vmul.f32 %v891, %v900
  %v902 = vmul.f32 %v892, %v900
  %v903 = vmul.f32 %v893, %v900
  %v904 = vmul.f32 %v894, %v900
  %v905 = vlaneseq
  %v906 = vshrl.u32 %v905, 7
  %v907 = vsub.s32 4, %v906
  %v908 = vrot.slane %v89, %v907
  %v909 = vmul.f32 %v901, %v908
  %v910 = vmul.f32 %v902, %v908
  %v911 = vmul.f32 %v903, %v908
  %v912 = vmul.f32 %v904, %v908
  %v913 = vlaneseq
  %v914 = vshrl.u32 %v913, 7
  %v915 = vsub.s32 5, %v914
  %v916 = vrot.slane %v89, %v915
  %v917 = vadd.f32 %v909, %v916
  %v918 = vadd.f32 %v910, %v916
  %v919 = vadd.f32 %v911, %v916
  %v920 = vadd.f32 %v912, %v916
  %v921 = vpack.c.bf16 %v25, %v24
  %v922 = vpack.c.bf16 %v27, %v26
  %v923 = vld [vmem:[%s5] sm:$0xf]
  %v924 = vld [vmem:[%s5 + $0x4] sm:$0xf]
  %v925 = vld [vmem:[%s5 + $0x8] sm:$0xf]
  %v926 = vld [vmem:[%s5 + $0xc] sm:$0xf]
  %v927 = vld [vmem:[%s5 + $0x10] sm:$0xf]
  %v928 = vld [vmem:[%s5 + $0x14] sm:$0xf]
  %v929 = vld [vmem:[%s5 + $0x18] sm:$0xf]
  %v930 = vld [vmem:[%s5 + $0x1c] sm:$0xf]
  %v931 = vlaneseq
  %v932 = vshrl.u32 %v931, 7
  %v933 = vsub.s32 6, %v932
  %v934 = vrot.slane %v89, %v933
  %v943 = vunpack.c.l.b16 %v923
  %v944 = vunpack.c.l.b16 %v924
  %v945 = vunpack.c.l.b16 %v925
  %v946 = vunpack.c.l.b16 %v926
  %v947 = vunpack.c.l.b16 %v927
  %v948 = vunpack.c.l.b16 %v928
  %v949 = vunpack.c.l.b16 %v929
  %v950 = vunpack.c.l.b16 %v930
  %v951 = vpack.c.b16 %v944, %v943
  %v952 = vpack.c.b16 %v946, %v945
  %v953 = vpack.c.b16 %v948, %v947
  %v954 = vpack.c.b16 %v950, %v949
  %v960 = vsel %vm148, %v921, 0
  %v963 = vsel %vm148, %v922, 0
  %965 = vmatprep.subr.bf16.mxu0 0
  %966 = vmatpush1.bf16.msra.mxu0 0
  %967 = vmatprep.subr.bf16.mxu0 0
  %968 = vmatpush1.bf16.msra.mxu0 0
  %969 = vmatprep.subr.bf16.mxu0 0
  %970 = vmatpush1.bf16.msra.mxu0 0
  %971 = vmatprep.subr.bf16.mxu0 0
  %972 = vmatpush1.bf16.msra.mxu0 0
  %973 = vmatprep.subr.bf16.mxu0 0
  %974 = vmatpush1.bf16.msra.mxu0 %v954
  %975 = vmatprep.subr.bf16.mxu0 0
  %976 = vmatpush1.bf16.msra.mxu0 %v953
  %977 = vmatprep.subr.bf16.mxu0 0
  %978 = vmatpush1.bf16.msra.mxu0 %v952
  %979 = vmatprep.subr.bf16.mxu0 0
  %980 = vmatpush1.bf16.msra.mxu0 %v951
  %981 = vmatprep.subr.bf16.mxu0 0
  %982 = vmatpush2.bf16.msra.mxu0 0
  %983 = vmatprep.subr.bf16.mxu0 0
  %984 = vmatpush2.bf16.msra.mxu0 0
  %985 = vmatprep.subr.bf16.mxu0 0
  %986 = vmatpush2.bf16.msra.mxu0 0
  %987 = vmatprep.subr.bf16.mxu0 0
  %988 = vmatpush2.bf16.msra.mxu0 0
  %989 = vmatprep.subr.bf16.mxu0 0
  %990 = vmatpush2.bf16.msra.mxu0 0
  %991 = vmatprep.subr.bf16.mxu0 0
  %992 = vmatpush2.bf16.msra.mxu0 0
  %993 = vmatprep.subr.bf16.mxu0 0
  %994 = vmatpush2.bf16.msra.mxu0 0
  %995 = vmatprep.subr.bf16.mxu0 0
  %996 = vmatpush2.bf16.msra.mxu0 0
  %997 = vmatprep.mubr.bf16.mxu0 0
  %998 = vmatmul.mubr.bf16.gmra.mxu0 %v960
  %v999 = vpop.f32.mrf.mxu0
  %v1000 = vadd.f32 %v934, %v999
  %v1001 = vpop.f32.mrf.mxu0
  %v1002 = vpop.f32.mrf.mxu0
  %v1003 = vadd.f32 %v934, %v1002
  %v1004 = vpop.f32.mrf.mxu0
  %1005 = vmatprep.mubr.bf16.mxu0 0
  %1006 = vmatmul.mubr.bf16.gmra.mxu0 %v963
  %v1007 = vpop.f32.mrf.mxu0
  %v1008 = vadd.f32 %v934, %v1007
  %v1009 = vpop.f32.mrf.mxu0
  %v1010 = vpop.f32.mrf.mxu0
  %v1011 = vadd.f32 %v934, %v1010
  %v1012 = vpop.f32.mrf.mxu0
  %1013 = vdwg.mxu0
  %v1014 = vadd.f32 %v917, %v1000
  %v1015 = vadd.f32 %v918, %v1003
  %v1016 = vadd.f32 %v919, %v1008
  %v1017 = vadd.f32 %v920, %v1011
  %v1018 = vmax.f32 %v1014, 0.0
  %v1019 = vmax.f32 %v1015, 0.0
  %v1020 = vmax.f32 %v1016, 0.0
  %v1021 = vmax.f32 %v1017, 0.0
  %1022 = vst [vmem:[%s6] sm:$0xff] %v1018
  %1023 = vst [vmem:[%s6 + $0x8] sm:$0xff] %v1019
  %1024 = vst [vmem:[%s6 + $0x10] sm:$0xff] %v1020
  %1025 = vst [vmem:[%s6 + $0x18] sm:$0xff] %v1021
  // Predicated region
  $region26: #{resnet_block_forward.1} parent=0 // pred_check
    _
  $region27: #{resnet_block_forward.1} parent=0 // pred_check_branch
    %1027 = sbr.rel (0) target = $region29
  $region28: #{resnet_block_forward.1} parent=0 // pred_region
    _
  $region29: #{resnet_block_forward.1} parent=0 // pred_fallthru
    _
  // Predicated region
  $region30: #{resnet_block_forward.1} parent=0 // pred_check
    _
  $region31: #{resnet_block_forward.1} parent=0 // pred_check_branch
    %1029 = sbr.rel (0) target = $region33
  $region32: #{resnet_block_forward.1} parent=0 // pred_region
    _
  $region33: #{resnet_block_forward.1} parent=0 // pred_fallthru
    _

</llo_original>
